<compile_context>
chip_gen: v7x
topology: tpu7x:2x2x1
jax: 0.10.0
libtpu: 0.0.40
codegen_flags: <defaults>
</compile_context>

<pallas_src>
import jax
import jax.numpy as jnp
from jax.experimental import pallas as pl
from jax.experimental.pallas import tpu as pltpu

_LEAKY_SLOPE = 0.01  # PyTorch F.leaky_relu default


def _mlp1_kernel(x_ref, w_ref, b_ref, pair_ref, o_ref):
    # x_ref:    (TB, P*n_mlp)   input dtype (P logical rows packed per row)
    # w_ref:    (P*n_mlp, 2P)   block-diagonal weight, input dtype
    # b_ref:    (1, 2P)         f32 bias (cols [0:P)=b0, [P:2P)=b1)
    # pair_ref: (2P, 2P)        f32 pairwise-difference matrix
    # o_ref:    (TB, 2P)        cols [0:P)=p0, [P:2P)=p1

    # Linear layer on the MXU with f32 accumulation.
    z = jnp.dot(x_ref[...], w_ref[...],
                preferred_element_type=jnp.float32) + b_ref[...]      # (TB, 2P)

    # LeakyReLU.
    z = jnp.where(z >= 0, z, _LEAKY_SLOPE * z)

    # Pairwise logit difference via a tiny resident matmul:
    #   d[:, j]   = z0_j - z1_j     for j <  P
    #   d[:, P+j] = z1_j - z0_j     for j >= P
    d = jnp.dot(z, pair_ref[...], preferred_element_type=jnp.float32)  # (TB, 2P)

    # 2-way softmax == sigmoid of the difference: softmax([a,b]) =
    # [sigmoid(a-b), sigmoid(b-a)].  Numerically stable sigmoid:
    e = jnp.exp(-jnp.abs(d))          # EUP
    s = 1.0 / (1.0 + e)               # sigmoid(|d|)
    o_ref[...] = jnp.where(d >= 0, s, 1.0 - s).astype(o_ref.dtype)


def mlp1_forward(x, weight, bias, *, block_rows=2048):
    """x: (B, n_mlp), weight: (2, n_mlp), bias: (2,) -> softmax probs (B, 2)."""
    B, n_mlp = x.shape
    assert weight.shape == (2, n_mlp) and bias.shape == (2,)
    cdtype = x.dtype

    # Lane-packing factor: how many logical rows share one 128-lane row.
    P = 128 // n_mlp if (0 < n_mlp <= 128 and 128 % n_mlp == 0) else 1

    # Block-diagonal weight (P*n_mlp, 2P): cols [0:P) -> class 0, [P:2P) -> class 1.
    wt = weight.T.astype(cdtype)                                   # (n_mlp, 2)
    eye_p = jnp.eye(P, dtype=cdtype)
    w_blk = jnp.concatenate(
        [jnp.kron(eye_p, wt[:, c:c + 1]) for c in range(2)], axis=1)
    b_blk = jnp.concatenate(
        [jnp.repeat(bias[c:c + 1].astype(jnp.float32), P) for c in range(2)]
    ).reshape(1, 2 * P)
    # Pairwise-difference matrix [[I, -I], [-I, I]].
    pair = jnp.kron(jnp.asarray([[1.0, -1.0], [-1.0, 1.0]], jnp.float32),
                    jnp.eye(P, dtype=jnp.float32))                 # (2P, 2P)

    # Pad the batch so the packed row count is a multiple of the tile size.
    rows = pl.cdiv(B, P)                               # packed rows needed
    tb = min(block_rows, ((rows + 7) // 8) * 8)        # sublane-aligned tile
    rows_padded = pl.cdiv(rows, tb) * tb
    b_padded = rows_padded * P
    if b_padded != B:
        x = jnp.pad(x, ((0, b_padded - B), (0, 0)))    # only when not tile-aligned
    x_packed = x.reshape(rows_padded, P * n_mlp)       # free row-major reshape

    out_packed = pl.pallas_call(
        _mlp1_kernel,
        out_shape=jax.ShapeDtypeStruct((rows_padded, 2 * P), cdtype),
        grid=(rows_padded // tb,),
        in_specs=[
            pl.BlockSpec((tb, P * n_mlp), lambda i: (i, 0)),      # streamed x
            pl.BlockSpec((P * n_mlp, 2 * P), lambda i: (0, 0)),   # resident W
            pl.BlockSpec((1, 2 * P), lambda i: (0, 0)),           # resident b
            pl.BlockSpec((2 * P, 2 * P), lambda i: (0, 0)),       # resident pair
        ],
        out_specs=pl.BlockSpec((tb, 2 * P), lambda i: (i, 0)),
        compiler_params=pltpu.CompilerParams(
            dimension_semantics=("parallel",)),        # shard over v7x's 2 TCs
    )(x_packed, w_blk, b_blk, pair)

    # Unpack (rows_padded, [p0 x P | p1 x P]) -> (B, 2).
    out = out_packed.reshape(rows_padded, 2, P).transpose(0, 2, 1)
    return out.reshape(b_padded, 2)[:B]


def _reference(x, weight, bias):
    z = x @ weight.T + bias
    z = jnp.where(z >= 0, z, _LEAKY_SLOPE * z)
    return jax.nn.softmax(z, axis=1)


if __name__ == "__main__":
    n_mlp = 32
    batch = 8

    key = jax.random.PRNGKey(0)
    kx, kw, kb = jax.random.split(key, 3)

    # Deterministic parameter init mimicking torch.nn.Linear's uniform init.
    bound = 1.0 / (n_mlp ** 0.5)
    weight = jax.random.uniform(kw, (2, n_mlp), jnp.float32, -bound, bound)
    bias = jax.random.uniform(kb, (2,), jnp.float32, -bound, bound)
    x = jax.random.normal(kx, (batch, n_mlp), jnp.float32)

    out = jax.block_until_ready(mlp1_forward(x, weight, bias))
    ref = _reference(x, weight, bias)
    assert out.shape == (batch, 2), out.shape
    assert jnp.allclose(out, ref, atol=1e-5, rtol=1e-5), (out, ref)
    assert jnp.allclose(jnp.sum(out, axis=1), 1.0, atol=1e-5)

    # Exercise the multi-tile + padded-batch path (non-aligned B, grid > 1).
    x2 = jax.random.normal(jax.random.PRNGKey(1), (100, n_mlp), jnp.float32)
    out2 = jax.block_until_ready(mlp1_forward(x2, weight, bias, block_rows=8))
    ref2 = _reference(x2, weight, bias)
    assert out2.shape == (100, 2), out2.shape
    assert jnp.allclose(out2, ref2, atol=1e-5, rtol=1e-5)

    print("KERNEL_OK")
</pallas_src>

<mosaic_0001>
module attributes {stable_mosaic.version = 11 : i64} {
  func.func @_mlp1_kernel(%arg0: i32, %arg1: memref<8x128xf32, #tpu.memory_space<vmem>>, %arg2: memref<128x8xf32, #tpu.memory_space<vmem>>, %arg3: memref<1x8xf32, #tpu.memory_space<vmem>>, %arg4: memref<8x8xf32, #tpu.memory_space<vmem>>, %arg5: memref<8x8xf32, #tpu.memory_space<vmem>>) attributes {dimension_semantics = [#tpu.dimension_semantics<parallel>], iteration_bounds = array<i64: 1>, scalar_prefetch = 0 : i64, scratch_operands = 0 : i64, tpu.core_type = #tpu.core_type<tc>, window_params = [{transform_indices = @transform_0, window_bounds = array<i64: 8, 128>}, {pipeline_mode = #tpu.pipeline_mode<synchronous>, transform_indices = @transform_1, window_bounds = array<i64: 128, 8>}, {pipeline_mode = #tpu.pipeline_mode<synchronous>, transform_indices = @transform_2, window_bounds = array<i64: 1, 8>}, {pipeline_mode = #tpu.pipeline_mode<synchronous>, transform_indices = @transform_3, window_bounds = array<i64: 8, 8>}, {transform_indices = @transform_4, window_bounds = array<i64: 8, 8>}]} {
    %c0 = arith.constant 0 : index
    %c0_0 = arith.constant 0 : index
    %0 = vector.load %arg1[%c0, %c0_0] : memref<8x128xf32, #tpu.memory_space<vmem>>, vector<8x128xf32>
    %c0_1 = arith.constant 0 : index
    %c0_2 = arith.constant 0 : index
    %1 = vector.load %arg2[%c0_1, %c0_2] : memref<128x8xf32, #tpu.memory_space<vmem>>, vector<128x8xf32>
    %cst = arith.constant dense<0.000000e+00> : vector<8x8xf32>
    %2 = tpu.matmul %0, %1, %cst {dimension_numbers = #tpu.dot_dimension_numbers<[1], [0], [0], [1], [0, 0, 1, 1], [], []>} : vector<8x128xf32>, vector<128x8xf32>, vector<8x8xf32> -> vector<8x8xf32>
    %c0_3 = arith.constant 0 : index
    %c0_4 = arith.constant 0 : index
    %3 = vector.load %arg3[%c0_3, %c0_4] : memref<1x8xf32, #tpu.memory_space<vmem>>, vector<1x8xf32>
    %4 = vector.broadcast %3 : vector<1x8xf32> to vector<8x8xf32>
    %5 = arith.addf %2, %4 : vector<8x8xf32>
    %cst_5 = arith.constant 0.000000e+00 : f32
    %6 = vector.broadcast %cst_5 : f32 to vector<8x8xf32>
    %7 = arith.cmpf oge, %5, %6 : vector<8x8xf32>
    %cst_6 = arith.constant 0.00999999977 : f32
    %8 = vector.broadcast %cst_6 : f32 to vector<8x8xf32>
    %9 = arith.mulf %8, %5 : vector<8x8xf32>
    %10 = arith.select %7, %5, %9 : vector<8x8xi1>, vector<8x8xf32>
    %c0_7 = arith.constant 0 : index
    %c0_8 = arith.constant 0 : index
    %11 = vector.load %arg4[%c0_7, %c0_8] : memref<8x8xf32, #tpu.memory_space<vmem>>, vector<8x8xf32>
    %cst_9 = arith.constant dense<0.000000e+00> : vector<8x8xf32>
    %12 = tpu.matmul %10, %11, %cst_9 {dimension_numbers = #tpu.dot_dimension_numbers<[1], [0], [0], [1], [0, 0, 1, 1], [], []>} : vector<8x8xf32>, vector<8x8xf32>, vector<8x8xf32> -> vector<8x8xf32>
    %13 = math.absf %12 : vector<8x8xf32>
    %cst_10 = arith.constant 0.000000e+00 : f32
    %14 = vector.broadcast %cst_10 : f32 to vector<8x8xf32>
    %15 = arith.subf %14, %13 : vector<8x8xf32>
    %16 = math.exp %15 : vector<8x8xf32>
    %cst_11 = arith.constant 1.000000e+00 : f32
    %17 = vector.broadcast %cst_11 : f32 to vector<8x8xf32>
    %18 = arith.addf %17, %16 : vector<8x8xf32>
    %cst_12 = arith.constant 1.000000e+00 : f32
    %19 = vector.broadcast %cst_12 : f32 to vector<8x8xf32>
    %20 = arith.divf %19, %18 : vector<8x8xf32>
    %cst_13 = arith.constant 0.000000e+00 : f32
    %21 = vector.broadcast %cst_13 : f32 to vector<8x8xf32>
    %22 = arith.cmpf oge, %12, %21 : vector<8x8xf32>
    %cst_14 = arith.constant 1.000000e+00 : f32
    %23 = vector.broadcast %cst_14 : f32 to vector<8x8xf32>
    %24 = arith.subf %23, %20 : vector<8x8xf32>
    %25 = arith.select %22, %20, %24 : vector<8x8xi1>, vector<8x8xf32>
    %c0_15 = arith.constant 0 : index
    %c0_16 = arith.constant 0 : index
    %26 = vector.load %arg5[%c0_15, %c0_16] : memref<8x8xf32, #tpu.memory_space<vmem>>, vector<8x8xf32>
    tpu.vector_store %arg5[%c0_15, %c0_16], %25 {strides = array<i32>} : memref<8x8xf32, #tpu.memory_space<vmem>>, vector<8x8xf32>,
    return
  }
  func.func @transform_0(%arg0: i32) -> (i32, i32) {
    %c0_i32 = arith.constant 0 : i32
    %c0_i32_0 = arith.constant 0 : i32
    return %arg0, %c0_i32 : i32, i32
  }
  func.func @transform_1(%arg0: i32) -> (i32, i32) {
    %c0_i32 = arith.constant 0 : i32
    %c0_i32_0 = arith.constant 0 : i32
    %c0_i32_1 = arith.constant 0 : i32
    return %c0_i32, %c0_i32_0 : i32, i32
  }
  func.func @transform_2(%arg0: i32) -> (i32, i32) {
    %c0_i32 = arith.constant 0 : i32
    %c0_i32_0 = arith.constant 0 : i32
    %c0_i32_1 = arith.constant 0 : i32
    return %c0_i32, %c0_i32_0 : i32, i32
  }
  func.func @transform_3(%arg0: i32) -> (i32, i32) {
    %c0_i32 = arith.constant 0 : i32
    %c0_i32_0 = arith.constant 0 : i32
    %c0_i32_1 = arith.constant 0 : i32
    return %c0_i32, %c0_i32_0 : i32, i32
  }
  func.func @transform_4(%arg0: i32) -> (i32, i32) {
    %c0_i32 = arith.constant 0 : i32
    %c0_i32_0 = arith.constant 0 : i32
    return %arg0, %c0_i32 : i32, i32
  }
}

</mosaic_0001>

<llo_original>
// kernel: tpu_custom_call.1
$region0: #{tpu_custom_call.1}
  #allocation0 [shape = 'u32[]', space=smem, size = 0x4, offset = 0x4, fixed_abs, tag = 'smem constant byte address 0x4 - core index']
  #allocation1 [shape = 'u32[144,128]{1,0:T(1,128)}', space=vmem, size = 0x12000, scoped, tag = 'internal scratch']
  %s0 = inlined_call_operand.vmem [shape: f32[8,128], index: 0, kind: input, shape index: {}]
  %s1 = inlined_call_operand.vmem [shape: f32[128,8], index: 1, kind: input, shape index: {}]
  %s2 = inlined_call_operand.vmem [shape: f32[1,8], index: 2, kind: input, shape index: {}]
  %s3 = inlined_call_operand.vmem [shape: f32[8,8], index: 3, kind: input, shape index: {}]
  %s4 = inlined_call_operand.hbm [shape: f32[8,8], index: 4, kind: output, shape index: {}]
  %s5 = sld [smem:[#allocation0]]
  $region26: #{tpu_custom_call.1} parent=0
    _
  %s7 = ssub.s32 1, %s5
  %s8 = scalar_select 0, %s7, %s5
  $region1: #{tpu_custom_call.1} parent=0
    #allocation2 [shape = 'u8[4096]{0}', space=vmem, size = 0x1000, scoped, tag = 'output window, operand 0, single buffered']
    #allocation3 [shape = 's32[1]{0}', space=sflag, size = 0x4, scoped, tag = 'scoped memory for tpu_custom_call.1']
    %9 = vsyncpa [#allocation3], 0
    // Predicated region
    $region2: #{tpu_custom_call.1} parent=1 // pred_check
      _
    $region3: #{tpu_custom_call.1} parent=1 // pred_check_branch
      %11 = sbr.rel (0) target = $region5
    $region4: #{tpu_custom_call.1} parent=1 // pred_region
      _
    $region5: #{tpu_custom_call.1} parent=1 // pred_fallthru
      _
    // Predicated region
    $region6: #{tpu_custom_call.1} parent=1 // pred_check
      _
    $region7: #{tpu_custom_call.1} parent=1 // pred_check_branch
      %13 = sbr.rel (0) target = $region9
    $region8: #{tpu_custom_call.1} parent=1 // pred_region
      _
    $region9: #{tpu_custom_call.1} parent=1 // pred_fallthru
      _
    // Predicated region
    $region10: #{tpu_custom_call.1} parent=1 // pred_check
      _
    $region11: #{tpu_custom_call.1} parent=1 // pred_check_branch
      %15 = sbr.rel (0) target = $region13
    $region12: #{tpu_custom_call.1} parent=1 // pred_region
      _
    $region13: #{tpu_custom_call.1} parent=1 // pred_fallthru
      _
    // Predicated region
    $region14: #{tpu_custom_call.1} parent=1 // pred_check
      _
    $region15: #{tpu_custom_call.1} parent=1 // pred_check_branch
      %17 = sbr.rel (0) target = $region17
    $region16: #{tpu_custom_call.1} parent=1 // pred_region
      _
    $region17: #{tpu_custom_call.1} parent=1 // pred_fallthru
      _
    %v18 = vld [vmem:[%s0] sm:$0xff]
    %v19 = vld [vmem:[%s1] sm:$0xff]
    %v20 = vld [vmem:[%s1 + $0x8] sm:$0xff]
    %v21 = vld [vmem:[%s1 + $0x10] sm:$0xff]
    %v22 = vld [vmem:[%s1 + $0x18] sm:$0xff]
    %v23 = vld [vmem:[%s1 + $0x20] sm:$0xff]
    %v24 = vld [vmem:[%s1 + $0x28] sm:$0xff]
    %v25 = vld [vmem:[%s1 + $0x30] sm:$0xff]
    %v26 = vld [vmem:[%s1 + $0x38] sm:$0xff]
    %v27 = vld [vmem:[%s1 + $0x40] sm:$0xff]
    %v28 = vld [vmem:[%s1 + $0x48] sm:$0xff]
    %v29 = vld [vmem:[%s1 + $0x50] sm:$0xff]
    %v30 = vld [vmem:[%s1 + $0x58] sm:$0xff]
    %v31 = vld [vmem:[%s1 + $0x60] sm:$0xff]
    %v32 = vld [vmem:[%s1 + $0x68] sm:$0xff]
    %v33 = vld [vmem:[%s1 + $0x70] sm:$0xff]
    %v34 = vld [vmem:[%s1 + $0x78] sm:$0xff]
    %v35 = vld [vmem:[%s2] sm:$0x1]
    %v37 = vlaneseq
    %v38 = vshrl.u32 %v37, 7
    %v39 = vsub.s32 0, %v38
    %v40 = vrot.slane %v35, %v39
    %42 = vmatprep.subr.mxu0 0.0
    %43 = vmatpush1.msra.mxu0 %v19
    %44 = vmatprep.subr.mxu0 0.0
    %45 = vmatpush1.msra.mxu0 %v20
    %46 = vmatprep.subr.mxu0 0.0
    %47 = vmatpush1.msra.mxu0 %v21
    %48 = vmatprep.subr.mxu0 0.0
    %49 = vmatpush1.msra.mxu0 %v22
    %50 = vmatprep.subr.mxu0 0.0
    %51 = vmatpush1.msra.mxu0 %v23
    %52 = vmatprep.subr.mxu0 0.0
    %53 = vmatpush1.msra.mxu0 %v24
    %54 = vmatprep.subr.mxu0 0.0
    %55 = vmatpush1.msra.mxu0 %v25
    %56 = vmatprep.subr.mxu0 0.0
    %57 = vmatpush1.msra.mxu0 %v26
    %58 = vmatprep.subr.mxu0 0.0
    %59 = vmatpush1.msra.mxu0 %v27
    %60 = vmatprep.subr.mxu0 0.0
    %61 = vmatpush1.msra.mxu0 %v28
    %62 = vmatprep.subr.mxu0 0.0
    %63 = vmatpush1.msra.mxu0 %v29
    %64 = vmatprep.subr.mxu0 0.0
    %65 = vmatpush1.msra.mxu0 %v30
    %66 = vmatprep.subr.mxu0 0.0
    %67 = vmatpush1.msra.mxu0 %v31
    %68 = vmatprep.subr.mxu0 0.0
    %69 = vmatpush1.msra.mxu0 %v32
    %70 = vmatprep.subr.mxu0 0.0
    %71 = vmatpush1.msra.mxu0 %v33
    %72 = vmatprep.subr.mxu0 0.0
    %73 = vmatpush1.msra.mxu0 %v34
    %74 = vmatprep.subr.mxu0 0.0
    %75 = vmatpush1.msra.mxu0 0.0
    %76 = vmatprep.subr.mxu0 0.0
    %77 = vmatpush1.msra.mxu0 0.0
    %78 = vmatprep.subr.mxu0 0.0
    %79 = vmatpush1.msra.mxu0 0.0
    %80 = vmatprep.subr.mxu0 0.0
    %81 = vmatpush1.msra.mxu0 0.0
    %82 = vmatprep.subr.mxu0 0.0
    %83 = vmatpush1.msra.mxu0 0.0
    %84 = vmatprep.subr.mxu0 0.0
    %85 = vmatpush1.msra.mxu0 0.0
    %86 = vmatprep.subr.mxu0 0.0
    %87 = vmatpush1.msra.mxu0 0.0
    %88 = vmatprep.subr.mxu0 0.0
    %89 = vmatpush1.msra.mxu0 0.0
    %90 = vmatprep.subr.mxu0 0.0
    %91 = vmatpush1.msra.mxu0 0.0
    %92 = vmatprep.subr.mxu0 0.0
    %93 = vmatpush1.msra.mxu0 0.0
    %94 = vmatprep.subr.mxu0 0.0
    %95 = vmatpush1.msra.mxu0 0.0
    %96 = vmatprep.subr.mxu0 0.0
    %97 = vmatpush1.msra.mxu0 0.0
    %98 = vmatprep.subr.mxu0 0.0
    %99 = vmatpush1.msra.mxu0 0.0
    %100 = vmatprep.subr.mxu0 0.0
    %101 = vmatpush1.msra.mxu0 0.0
    %102 = vmatprep.subr.mxu0 0.0
    %103 = vmatpush1.msra.mxu0 0.0
    %104 = vmatprep.subr.mxu0 0.0
    %105 = vmatpush1.msra.mxu0 0.0
    %106 = vmatprep.mubr.f32.mxu0 0.0
    %107 = vmatmul.mubr.f32.gmra.mrb[0].mxu0 %v18
    %v108 = vpop.f32.mrb[0].mxu0
    %v109 = vadd.f32 %v40, %v108
    %v110 = vpop.f32.mrb[0].mxu0
    %111 = vdwg.mxu0
    %vm112 = vcmp.ge.f32.partialorder %v109, 0.0
    %v113 = vmul.f32 %v109, 0.01
    %v114 = vsel %vm112, %v109, %v113
    %v115 = vld [vmem:[%s3] sm:$0xff]
    %vm116 = vcmask 64512
    %v118 = vsel %vm116, %v114, 0
    %120 = vmatprep.subr.mxu0 0.0
    %121 = vmatpush1.msra.mxu0 %v115
    %122 = vmatprep.subr.mxu0 0.0
    %123 = vmatpush1.msra.mxu0 0.0
    %124 = vmatprep.subr.mxu0 0.0
    %125 = vmatpush1.msra.mxu0 0.0
    %126 = vmatprep.subr.mxu0 0.0
    %127 = vmatpush1.msra.mxu0 0.0
    %128 = vmatprep.subr.mxu0 0.0
    %129 = vmatpush1.msra.mxu0 0.0
    %130 = vmatprep.subr.mxu0 0.0
    %131 = vmatpush1.msra.mxu0 0.0
    %132 = vmatprep.subr.mxu0 0.0
    %133 = vmatpush1.msra.mxu0 0.0
    %134 = vmatprep.subr.mxu0 0.0
    %135 = vmatpush1.msra.mxu0 0.0
    %136 = vmatprep.subr.mxu0 0.0
    %137 = vmatpush1.msra.mxu0 0.0
    %138 = vmatprep.subr.mxu0 0.0
    %139 = vmatpush1.msra.mxu0 0.0
    %140 = vmatprep.subr.mxu0 0.0
    %141 = vmatpush1.msra.mxu0 0.0
    %142 = vmatprep.subr.mxu0 0.0
    %143 = vmatpush1.msra.mxu0 0.0
    %144 = vmatprep.subr.mxu0 0.0
    %145 = vmatpush1.msra.mxu0 0.0
    %146 = vmatprep.subr.mxu0 0.0
    %147 = vmatpush1.msra.mxu0 0.0
    %148 = vmatprep.subr.mxu0 0.0
    %149 = vmatpush1.msra.mxu0 0.0
    %150 = vmatprep.subr.mxu0 0.0
    %151 = vmatpush1.msra.mxu0 0.0
    %152 = vmatprep.subr.mxu0 0.0
    %153 = vmatpush1.msra.mxu0 0.0
    %154 = vmatprep.subr.mxu0 0.0
    %155 = vmatpush1.msra.mxu0 0.0
    %156 = vmatprep.subr.mxu0 0.0
    %157 = vmatpush1.msra.mxu0 0.0
    %158 = vmatprep.subr.mxu0 0.0
    %159 = vmatpush1.msra.mxu0 0.0
    %160 = vmatprep.subr.mxu0 0.0
    %161 = vmatpush1.msra.mxu0 0.0
    %162 = vmatprep.subr.mxu0 0.0
    %163 = vmatpush1.msra.mxu0 0.0
    %164 = vmatprep.subr.mxu0 0.0
    %165 = vmatpush1.msra.mxu0 0.0
    %166 = vmatprep.subr.mxu0 0.0
    %167 = vmatpush1.msra.mxu0 0.0
    %168 = vmatprep.subr.mxu0 0.0
    %169 = vmatpush1.msra.mxu0 0.0
    %170 = vmatprep.subr.mxu0 0.0
    %171 = vmatpush1.msra.mxu0 0.0
    %172 = vmatprep.subr.mxu0 0.0
    %173 = vmatpush1.msra.mxu0 0.0
    %174 = vmatprep.subr.mxu0 0.0
    %175 = vmatpush1.msra.mxu0 0.0
    %176 = vmatprep.subr.mxu0 0.0
    %177 = vmatpush1.msra.mxu0 0.0
    %178 = vmatprep.subr.mxu0 0.0
    %179 = vmatpush1.msra.mxu0 0.0
    %180 = vmatprep.subr.mxu0 0.0
    %181 = vmatpush1.msra.mxu0 0.0
    %182 = vmatprep.subr.mxu0 0.0
    %183 = vmatpush1.msra.mxu0 0.0
    %184 = vmatprep.mubr.f32.mxu0 0.0
    %185 = vmatmul.mubr.f32.gmra.mrb[0].mxu0 %v118
    %v186 = vpop.f32.mrb[0].mxu0
    %v187 = vadd.f32 0.0, %v186
    %v188 = vpop.f32.mrb[0].mxu0
    %189 = vdwg.mxu0
    %v190 = vand.u32 2147483647, %v187
    %v191 = vsub.f32 0.0, %v190
    %v192 = vmul.f32 %v191, 1.442695
    %v193 = vpow.pop %v192
    %v194 = vadd.f32 %v193, 1.0
    %v195 = vrcp.pop %v194
    %v196 = vmul.f32 1.0, %v195
    %vm197 = vcmp.ge.f32.partialorder %v187, 0.0
    %v198 = vsub.f32 1.0, %v196
    %v199 = vsel %vm197, %v196, %v198
    %200 = vst.msk [vmem:[#allocation2] sm:$0xff] %vm116, %v199
    // Predicated region
    $region18: #{tpu_custom_call.1} parent=1 // pred_check
      _
    $region19: #{tpu_custom_call.1} parent=1 // pred_check_branch
      %202 = sbr.rel (0) target = $region21
    $region20: #{tpu_custom_call.1} parent=1 // pred_region
      %s204 = ssub.s32 128, 128
      %205 = vsyncadd [#allocation3], %s204
      %s207 = sshll.u32 [#allocation2], 4
      %s208 = int_to_ptr.vmem [resolvable:$true] %s207
      %210 = dma.vmem_to_hbm [thread:$0]  %s208, 128, %s4, [#allocation3]
    $region21: #{tpu_custom_call.1} parent=1 // pred_fallthru
      _
    // Predicated region
    $region22: #{tpu_custom_call.1} parent=1 // pred_check
      _
    $region23: #{tpu_custom_call.1} parent=1 // pred_check_branch
      %212 = sbr.rel (0) target = $region25
    $region24: #{tpu_custom_call.1} parent=1 // pred_region
      %213 = dma.done [#allocation3], 128
    $region25: #{tpu_custom_call.1} parent=1 // pred_fallthru
      _
    %214 = vsyncpa [#allocation3], 1

</llo_original>
